<compile_context>
chip_gen: v7x
topology: tpu7x:2x2x1
jax: 0.10.0
libtpu: 0.0.40
codegen_flags: <defaults>
</compile_context>

<pallas_src>
import math
import jax
import jax.numpy as jnp
from jax.experimental import pallas as pl
from jax.experimental.pallas import tpu as pltpu


def _qkv_head_proj_kernel(xq_ref, xk_ref, xv_ref,
                          wq_ref, wk_ref, wv_ref,
                          bq_ref, bk_ref, bv_ref,
                          oq_ref, ok_ref, ov_ref):
    """One (batch, seq-tile, head) grid step: o = x @ W_head + b_head.

    x : (1, tile_s, D)      bf16 activation block (resident across head axis)
    W : (1, D, d_k)         bf16 per-head slice of W.T
    b : (1, 1, d_k)         bf16 per-head bias slice
    o : (1, 1, tile_s, d_k) written straight into the (B, h, S, d_k) output
    """
    def proj(x_ref, w_ref, b_ref, o_ref):
        acc = jnp.dot(x_ref[0], w_ref[0],
                      preferred_element_type=jnp.float32)       # MXU, f32 accum
        acc = acc + b_ref[0].astype(jnp.float32)
        o_ref[0, 0] = acc.astype(o_ref.dtype)

    proj(xq_ref, wq_ref, bq_ref, oq_ref)
    proj(xk_ref, wk_ref, bk_ref, ok_ref)
    proj(xv_ref, wv_ref, bv_ref, ov_ref)


def _pick_seq_tile(S, cap=512):
    """Largest sequence tile <= cap that divides S (multiple of 8 if not S)."""
    if S <= cap:
        return S
    for t in range(cap, 0, -1):
        if S % t == 0 and t % 8 == 0:
            return t
    return S


def qkv_head_projections(xq, xk, xv,
                         wq_h, wk_h, wv_h,
                         bq_h, bk_h, bv_h,
                         *, out_dtype=jnp.bfloat16, seq_tile_cap=512):
    """xq/xk/xv: (B, S, D).  w*_h: (h, D, d_k) = head slices of W.T.  b*_h: (h, 1, d_k).

    Returns three (B, h, S, d_k) tensors (head split fused into the output spec).
    """
    B, S, D = xq.shape
    h, Dw, d_k = wq_h.shape
    assert Dw == D
    # TODO(synk): for peak perf d_model should be a multiple of 128 and
    # d_k >= 128; the small demo shapes rely on full-dim blocks instead.
    # TODO(synk): add a K (contraction) grid axis + f32 VMEM accumulator for
    # very large d_model; untiled K is fine for typical d_model.

    tile_s = _pick_seq_tile(S, seq_tile_cap)
    grid = (B, S // tile_s, h)

    x_spec = pl.BlockSpec((1, tile_s, D), lambda b, s, hh: (b, s, 0))
    w_spec = pl.BlockSpec((1, D, d_k), lambda b, s, hh: (hh, 0, 0))
    b_spec = pl.BlockSpec((1, 1, d_k), lambda b, s, hh: (hh, 0, 0))
    o_spec = pl.BlockSpec((1, 1, tile_s, d_k), lambda b, s, hh: (b, hh, s, 0))

    out_shape = [jax.ShapeDtypeStruct((B, h, S, d_k), out_dtype)] * 3

    # Explicit VMEM budget from the per-step footprint (double-buffered),
    # clamped to a v7x-safe 48 MiB.
    in_item = jnp.dtype(xq.dtype).itemsize
    out_item = jnp.dtype(out_dtype).itemsize
    per_step = (3 * tile_s * D * in_item      # xq / xk / xv tiles
                + 3 * D * d_k * in_item       # per-head weight slices
                + 3 * d_k * in_item           # biases
                + 3 * tile_s * d_k * out_item)  # output tiles
    vmem_limit = int(min(max(3 * per_step + (2 << 20), 16 << 20), 48 << 20))

    return pl.pallas_call(
        _qkv_head_proj_kernel,
        out_shape=out_shape,
        grid_spec=pltpu.PrefetchScalarGridSpec(
            num_scalar_prefetch=0,
            grid=grid,
            in_specs=[x_spec, x_spec, x_spec,
                      w_spec, w_spec, w_spec,
                      b_spec, b_spec, b_spec],
            out_specs=[o_spec, o_spec, o_spec],
        ),
        compiler_params=pltpu.CompilerParams(
            dimension_semantics=("parallel", "parallel", "parallel"),
            vmem_limit_bytes=vmem_limit,
        ),
    )(xq, xk, xv, wq_h, wk_h, wv_h, bq_h, bk_h, bv_h)


class MultiHeadAttentionBlockPallas:
    def __init__(self, d_model: int, h: int, dropout: float, key,
                 compute_dtype=jnp.bfloat16):
        assert d_model % h == 0, "d_model is not divisible by h"
        self.d_model = d_model
        self.h = h
        self.d_k = d_model // h
        self.dropout = dropout          # created but never applied (matches reference)
        self.compute_dtype = compute_dtype

        ks = jax.random.split(key, 8)
        bound = 1.0 / math.sqrt(d_model)  # nn.Linear default init range

        def init_w(k):
            return jax.random.uniform(k, (d_model, d_model), jnp.float32,
                                      -bound, bound)

        def init_b(k):
            return jax.random.uniform(k, (d_model,), jnp.float32,
                                      -bound, bound)

        # f32 master parameters (PyTorch nn.Linear layout: W is (d_out, d_in)).
        self.wq, self.bq = init_w(ks[0]), init_b(ks[1])
        self.wk, self.bk = init_w(ks[2]), init_b(ks[3])
        self.wv, self.bv = init_w(ks[4]), init_b(ks[5])
        # w_o exists in __init__ but is never used by the reference forward.
        self.wo, self.bo = init_w(ks[6]), init_b(ks[7])

        # Hoisted, kernel-ready parameters (done ONCE, not per forward call):
        #   W.T -> (d_in, d_out) -> per-head slices (h, d_in, d_k), cast to bf16.
        def prep_w(w):
            wt = w.T.reshape(d_model, h, self.d_k)      # (D, h, d_k)
            return jnp.transpose(wt, (1, 0, 2)).astype(compute_dtype)

        def prep_b(b):
            return b.reshape(h, 1, self.d_k).astype(compute_dtype)

        self.wq_h, self.bq_h = prep_w(self.wq), prep_b(self.bq)
        self.wk_h, self.bk_h = prep_w(self.wk), prep_b(self.bk)
        self.wv_h, self.bv_h = prep_w(self.wv), prep_b(self.bv)
        # TODO(synk): when q is k is v (self-attention) the three weights could
        # be concatenated into one (D, 3D) matrix for a single fused matmul.

    def forward(self, q, k, v, mask=None):
        # mask is accepted but unused, exactly like the reference forward.
        xq = q.astype(self.compute_dtype)
        xk = k.astype(self.compute_dtype)
        xv = v.astype(self.compute_dtype)
        # Head split (view + transpose(1, 2)) is fused into the kernel's
        # output BlockSpec: results come back already as (B, h, S, d_k).
        return qkv_head_projections(
            xq, xk, xv,
            self.wq_h, self.wk_h, self.wv_h,
            self.bq_h, self.bk_h, self.bv_h,
            out_dtype=self.compute_dtype)


def _reference(q, k, v, blk):
    """Plain-JAX reference of the same forward (bf16 params, f32 accumulate)."""
    cd = blk.compute_dtype

    def lin(x, w, b):
        xc = x.astype(cd).astype(jnp.float32)
        wc = w.astype(cd).astype(jnp.float32)
        bc = b.astype(cd).astype(jnp.float32)
        return xc @ wc.T + bc

    B, S, D = q.shape

    def sh(x):
        return x.reshape(B, S, blk.h, blk.d_k).transpose(0, 2, 1, 3)

    return (sh(lin(q, blk.wq, blk.bq)),
            sh(lin(k, blk.wk, blk.bk)),
            sh(lin(v, blk.wv, blk.bv)))


if __name__ == "__main__":
    d_model, h, dropout = 32, 4, 0.1
    B, S = 2, 8

    key = jax.random.PRNGKey(0)
    k_params, kq, kk, kv = jax.random.split(key, 4)

    blk = MultiHeadAttentionBlockPallas(d_model, h, dropout, k_params)

    q = jax.random.normal(kq, (B, S, d_model), jnp.float32)
    k = jax.random.normal(kk, (B, S, d_model), jnp.float32)
    v = jax.random.normal(kv, (B, S, d_model), jnp.float32)
    mask = jnp.ones((B, 1, S, S), jnp.float32)   # unused, kept for signature parity

    out_q, out_k, out_v = blk.forward(q, k, v, mask)
    jax.block_until_ready((out_q, out_k, out_v))

    ref_q, ref_k, ref_v = _reference(q, k, v, blk)
    assert out_q.shape == (B, h, S, d_model // h)
    assert out_k.shape == (B, h, S, d_model // h)
    assert out_v.shape == (B, h, S, d_model // h)
    for got, ref in ((out_q, ref_q), (out_k, ref_k), (out_v, ref_v)):
        diff = jnp.max(jnp.abs(got.astype(jnp.float32) - ref))
        assert jnp.allclose(got.astype(jnp.float32), ref,
                            atol=5e-2, rtol=5e-2), float(diff)

    print("KERNEL_OK")
</pallas_src>

<mosaic_0001>
module attributes {stable_mosaic.version = 11 : i64} {
  func.func @_qkv_head_proj_kernel(%arg0: i32, %arg1: i32, %arg2: i32, %arg3: memref<1x8x32xbf16, #tpu.memory_space<vmem>>, %arg4: memref<1x8x32xbf16, #tpu.memory_space<vmem>>, %arg5: memref<1x8x32xbf16, #tpu.memory_space<vmem>>, %arg6: memref<1x32x8xbf16, #tpu.memory_space<vmem>>, %arg7: memref<1x32x8xbf16, #tpu.memory_space<vmem>>, %arg8: memref<1x32x8xbf16, #tpu.memory_space<vmem>>, %arg9: memref<1x1x8xbf16, #tpu.memory_space<vmem>>, %arg10: memref<1x1x8xbf16, #tpu.memory_space<vmem>>, %arg11: memref<1x1x8xbf16, #tpu.memory_space<vmem>>, %arg12: memref<1x1x8x8xbf16, #tpu.memory_space<vmem>>, %arg13: memref<1x1x8x8xbf16, #tpu.memory_space<vmem>>, %arg14: memref<1x1x8x8xbf16, #tpu.memory_space<vmem>>) attributes {dimension_semantics = [#tpu.dimension_semantics<parallel>, #tpu.dimension_semantics<parallel>, #tpu.dimension_semantics<parallel>], iteration_bounds = array<i64: 2, 1, 4>, scalar_prefetch = 0 : i64, scratch_operands = 0 : i64, tpu.core_type = #tpu.core_type<tc>, window_params = [{transform_indices = @transform_0, window_bounds = array<i64: 1, 8, 32>}, {transform_indices = @transform_1, window_bounds = array<i64: 1, 8, 32>}, {transform_indices = @transform_2, window_bounds = array<i64: 1, 8, 32>}, {transform_indices = @transform_3, window_bounds = array<i64: 1, 32, 8>}, {transform_indices = @transform_4, window_bounds = array<i64: 1, 32, 8>}, {transform_indices = @transform_5, window_bounds = array<i64: 1, 32, 8>}, {transform_indices = @transform_6, window_bounds = array<i64: 1, 1, 8>}, {transform_indices = @transform_7, window_bounds = array<i64: 1, 1, 8>}, {transform_indices = @transform_8, window_bounds = array<i64: 1, 1, 8>}, {transform_indices = @transform_9, window_bounds = array<i64: 1, 1, 8, 8>}, {transform_indices = @transform_10, window_bounds = array<i64: 1, 1, 8, 8>}, {transform_indices = @transform_11, window_bounds = array<i64: 1, 1, 8, 8>}]} {
    %c0 = arith.constant 0 : index
    %c0_0 = arith.constant 0 : index
    %c0_1 = arith.constant 0 : index
    %0 = vector.load %arg3[%c0, %c0_0, %c0_1] : memref<1x8x32xbf16, #tpu.memory_space<vmem>>, vector<1x8x32xbf16>
    %1 = vector.shape_cast %0 : vector<1x8x32xbf16> to vector<8x32xbf16>
    %c0_2 = arith.constant 0 : index
    %c0_3 = arith.constant 0 : index
    %c0_4 = arith.constant 0 : index
    %2 = vector.load %arg6[%c0_2, %c0_3, %c0_4] : memref<1x32x8xbf16, #tpu.memory_space<vmem>>, vector<1x32x8xbf16>
    %3 = vector.shape_cast %2 : vector<1x32x8xbf16> to vector<32x8xbf16>
    %cst = arith.constant dense<0.000000e+00> : vector<8x8xf32>
    %4 = tpu.matmul %1, %3, %cst {dimension_numbers = #tpu.dot_dimension_numbers<[1], [0], [0], [1], [0, 0, 1, 1], [], []>} : vector<8x32xbf16>, vector<32x8xbf16>, vector<8x8xf32> -> vector<8x8xf32>
    %c0_5 = arith.constant 0 : index
    %c0_6 = arith.constant 0 : index
    %c0_7 = arith.constant 0 : index
    %5 = vector.load %arg9[%c0_5, %c0_6, %c0_7] : memref<1x1x8xbf16, #tpu.memory_space<vmem>>, vector<1x1x8xbf16>
    %6 = vector.shape_cast %5 : vector<1x1x8xbf16> to vector<1x8xbf16>
    %7 = arith.extf %6 : vector<1x8xbf16> to vector<1x8xf32>
    %8 = vector.broadcast %7 : vector<1x8xf32> to vector<8x8xf32>
    %9 = arith.addf %4, %8 : vector<8x8xf32>
    %10 = arith.truncf %9 : vector<8x8xf32> to vector<8x8xbf16>
    %c0_8 = arith.constant 0 : index
    %c0_9 = arith.constant 0 : index
    %c0_10 = arith.constant 0 : index
    %c0_11 = arith.constant 0 : index
    %11 = vector.load %arg12[%c0_8, %c0_9, %c0_10, %c0_11] : memref<1x1x8x8xbf16, #tpu.memory_space<vmem>>, vector<1x1x8x8xbf16>
    %12 = vector.shape_cast %11 : vector<1x1x8x8xbf16> to vector<8x8xbf16>
    %13 = vector.shape_cast %10 : vector<8x8xbf16> to vector<1x1x8x8xbf16>
    tpu.vector_store %arg12[%c0_8, %c0_9, %c0_10, %c0_11], %13 {strides = array<i32>} : memref<1x1x8x8xbf16, #tpu.memory_space<vmem>>, vector<1x1x8x8xbf16>,
    %c0_12 = arith.constant 0 : index
    %c0_13 = arith.constant 0 : index
    %c0_14 = arith.constant 0 : index
    %14 = vector.load %arg4[%c0_12, %c0_13, %c0_14] : memref<1x8x32xbf16, #tpu.memory_space<vmem>>, vector<1x8x32xbf16>
    %15 = vector.shape_cast %14 : vector<1x8x32xbf16> to vector<8x32xbf16>
    %c0_15 = arith.constant 0 : index
    %c0_16 = arith.constant 0 : index
    %c0_17 = arith.constant 0 : index
    %16 = vector.load %arg7[%c0_15, %c0_16, %c0_17] : memref<1x32x8xbf16, #tpu.memory_space<vmem>>, vector<1x32x8xbf16>
    %17 = vector.shape_cast %16 : vector<1x32x8xbf16> to vector<32x8xbf16>
    %cst_18 = arith.constant dense<0.000000e+00> : vector<8x8xf32>
    %18 = tpu.matmul %15, %17, %cst_18 {dimension_numbers = #tpu.dot_dimension_numbers<[1], [0], [0], [1], [0, 0, 1, 1], [], []>} : vector<8x32xbf16>, vector<32x8xbf16>, vector<8x8xf32> -> vector<8x8xf32>
    %c0_19 = arith.constant 0 : index
    %c0_20 = arith.constant 0 : index
    %c0_21 = arith.constant 0 : index
    %19 = vector.load %arg10[%c0_19, %c0_20, %c0_21] : memref<1x1x8xbf16, #tpu.memory_space<vmem>>, vector<1x1x8xbf16>
    %20 = vector.shape_cast %19 : vector<1x1x8xbf16> to vector<1x8xbf16>
    %21 = arith.extf %20 : vector<1x8xbf16> to vector<1x8xf32>
    %22 = vector.broadcast %21 : vector<1x8xf32> to vector<8x8xf32>
    %23 = arith.addf %18, %22 : vector<8x8xf32>
    %24 = arith.truncf %23 : vector<8x8xf32> to vector<8x8xbf16>
    %c0_22 = arith.constant 0 : index
    %c0_23 = arith.constant 0 : index
    %c0_24 = arith.constant 0 : index
    %c0_25 = arith.constant 0 : index
    %25 = vector.load %arg13[%c0_22, %c0_23, %c0_24, %c0_25] : memref<1x1x8x8xbf16, #tpu.memory_space<vmem>>, vector<1x1x8x8xbf16>
    %26 = vector.shape_cast %25 : vector<1x1x8x8xbf16> to vector<8x8xbf16>
    %27 = vector.shape_cast %24 : vector<8x8xbf16> to vector<1x1x8x8xbf16>
    tpu.vector_store %arg13[%c0_22, %c0_23, %c0_24, %c0_25], %27 {strides = array<i32>} : memref<1x1x8x8xbf16, #tpu.memory_space<vmem>>, vector<1x1x8x8xbf16>,
    %c0_26 = arith.constant 0 : index
    %c0_27 = arith.constant 0 : index
    %c0_28 = arith.constant 0 : index
    %28 = vector.load %arg5[%c0_26, %c0_27, %c0_28] : memref<1x8x32xbf16, #tpu.memory_space<vmem>>, vector<1x8x32xbf16>
    %29 = vector.shape_cast %28 : vector<1x8x32xbf16> to vector<8x32xbf16>
    %c0_29 = arith.constant 0 : index
    %c0_30 = arith.constant 0 : index
    %c0_31 = arith.constant 0 : index
    %30 = vector.load %arg8[%c0_29, %c0_30, %c0_31] : memref<1x32x8xbf16, #tpu.memory_space<vmem>>, vector<1x32x8xbf16>
    %31 = vector.shape_cast %30 : vector<1x32x8xbf16> to vector<32x8xbf16>
    %cst_32 = arith.constant dense<0.000000e+00> : vector<8x8xf32>
    %32 = tpu.matmul %29, %31, %cst_32 {dimension_numbers = #tpu.dot_dimension_numbers<[1], [0], [0], [1], [0, 0, 1, 1], [], []>} : vector<8x32xbf16>, vector<32x8xbf16>, vector<8x8xf32> -> vector<8x8xf32>
    %c0_33 = arith.constant 0 : index
    %c0_34 = arith.constant 0 : index
    %c0_35 = arith.constant 0 : index
    %33 = vector.load %arg11[%c0_33, %c0_34, %c0_35] : memref<1x1x8xbf16, #tpu.memory_space<vmem>>, vector<1x1x8xbf16>
    %34 = vector.shape_cast %33 : vector<1x1x8xbf16> to vector<1x8xbf16>
    %35 = arith.extf %34 : vector<1x8xbf16> to vector<1x8xf32>
    %36 = vector.broadcast %35 : vector<1x8xf32> to vector<8x8xf32>
    %37 = arith.addf %32, %36 : vector<8x8xf32>
    %38 = arith.truncf %37 : vector<8x8xf32> to vector<8x8xbf16>
    %c0_36 = arith.constant 0 : index
    %c0_37 = arith.constant 0 : index
    %c0_38 = arith.constant 0 : index
    %c0_39 = arith.constant 0 : index
    %39 = vector.load %arg14[%c0_36, %c0_37, %c0_38, %c0_39] : memref<1x1x8x8xbf16, #tpu.memory_space<vmem>>, vector<1x1x8x8xbf16>
    %40 = vector.shape_cast %39 : vector<1x1x8x8xbf16> to vector<8x8xbf16>
    %41 = vector.shape_cast %38 : vector<8x8xbf16> to vector<1x1x8x8xbf16>
    tpu.vector_store %arg14[%c0_36, %c0_37, %c0_38, %c0_39], %41 {strides = array<i32>} : memref<1x1x8x8xbf16, #tpu.memory_space<vmem>>, vector<1x1x8x8xbf16>,
    return
  }
  func.func @transform_0(%arg0: i32, %arg1: i32, %arg2: i32) -> (i32, i32, i32) {
    %c0_i32 = arith.constant 0 : i32
    %c0_i32_0 = arith.constant 0 : i32
    return %arg0, %arg1, %c0_i32 : i32, i32, i32
  }
  func.func @transform_1(%arg0: i32, %arg1: i32, %arg2: i32) -> (i32, i32, i32) {
    %c0_i32 = arith.constant 0 : i32
    %c0_i32_0 = arith.constant 0 : i32
    return %arg0, %arg1, %c0_i32 : i32, i32, i32
  }
  func.func @transform_2(%arg0: i32, %arg1: i32, %arg2: i32) -> (i32, i32, i32) {
    %c0_i32 = arith.constant 0 : i32
    %c0_i32_0 = arith.constant 0 : i32
    return %arg0, %arg1, %c0_i32 : i32, i32, i32
  }
  func.func @transform_3(%arg0: i32, %arg1: i32, %arg2: i32) -> (i32, i32, i32) {
    %c0_i32 = arith.constant 0 : i32
    %c0_i32_0 = arith.constant 0 : i32
    %c0_i32_1 = arith.constant 0 : i32
    return %arg2, %c0_i32, %c0_i32_0 : i32, i32, i32
  }
  func.func @transform_4(%arg0: i32, %arg1: i32, %arg2: i32) -> (i32, i32, i32) {
    %c0_i32 = arith.constant 0 : i32
    %c0_i32_0 = arith.constant 0 : i32
    %c0_i32_1 = arith.constant 0 : i32
    return %arg2, %c0_i32, %c0_i32_0 : i32, i32, i32
  }
  func.func @transform_5(%arg0: i32, %arg1: i32, %arg2: i32) -> (i32, i32, i32) {
    %c0_i32 = arith.constant 0 : i32
    %c0_i32_0 = arith.constant 0 : i32
    %c0_i32_1 = arith.constant 0 : i32
    return %arg2, %c0_i32, %c0_i32_0 : i32, i32, i32
  }
  func.func @transform_6(%arg0: i32, %arg1: i32, %arg2: i32) -> (i32, i32, i32) {
    %c0_i32 = arith.constant 0 : i32
    %c0_i32_0 = arith.constant 0 : i32
    %c0_i32_1 = arith.constant 0 : i32
    return %arg2, %c0_i32, %c0_i32_0 : i32, i32, i32
  }
  func.func @transform_7(%arg0: i32, %arg1: i32, %arg2: i32) -> (i32, i32, i32) {
    %c0_i32 = arith.constant 0 : i32
    %c0_i32_0 = arith.constant 0 : i32
    %c0_i32_1 = arith.constant 0 : i32
    return %arg2, %c0_i32, %c0_i32_0 : i32, i32, i32
  }
  func.func @transform_8(%arg0: i32, %arg1: i32, %arg2: i32) -> (i32, i32, i32) {
    %c0_i32 = arith.constant 0 : i32
    %c0_i32_0 = arith.constant 0 : i32
    %c0_i32_1 = arith.constant 0 : i32
    return %arg2, %c0_i32, %c0_i32_0 : i32, i32, i32
  }
  func.func @transform_9(%arg0: i32, %arg1: i32, %arg2: i32) -> (i32, i32, i32, i32) {
    %c0_i32 = arith.constant 0 : i32
    %c0_i32_0 = arith.constant 0 : i32
    return %arg0, %arg2, %arg1, %c0_i32 : i32, i32, i32, i32
  }
  func.func @transform_10(%arg0: i32, %arg1: i32, %arg2: i32) -> (i32, i32, i32, i32) {
    %c0_i32 = arith.constant 0 : i32
    %c0_i32_0 = arith.constant 0 : i32
    return %arg0, %arg2, %arg1, %c0_i32 : i32, i32, i32, i32
  }
  func.func @transform_11(%arg0: i32, %arg1: i32, %arg2: i32) -> (i32, i32, i32, i32) {
    %c0_i32 = arith.constant 0 : i32
    %c0_i32_0 = arith.constant 0 : i32
    return %arg0, %arg2, %arg1, %c0_i32 : i32, i32, i32, i32
  }
}

</mosaic_0001>

<llo_original>
// kernel: tpu_custom_call.1
$region0: #{tpu_custom_call.1}
  #allocation0 [shape = 'u32[]', space=smem, size = 0x4, offset = 0x4, fixed_abs, tag = 'smem constant byte address 0x4 - core index']
  #allocation1 [shape = 'u32[144,128]{1,0:T(1,128)}', space=vmem, size = 0x12000, scoped, tag = 'internal scratch']
  %s0 = inlined_call_operand.vmem [shape: bf16[2,8,32], index: 0, kind: input, shape index: {}]
  %s1 = inlined_call_operand.vmem [shape: bf16[2,8,32], index: 1, kind: input, shape index: {}]
  %s2 = inlined_call_operand.vmem [shape: bf16[2,8,32], index: 2, kind: input, shape index: {}]
  %s3 = inlined_call_operand.vmem [shape: bf16[4,32,8], index: 3, kind: input, shape index: {}]
  %s4 = inlined_call_operand.vmem [shape: bf16[4,32,8], index: 4, kind: input, shape index: {}]
  %s5 = inlined_call_operand.vmem [shape: bf16[4,32,8], index: 5, kind: input, shape index: {}]
  %s6 = inlined_call_operand.vmem [shape: bf16[4,1,8], index: 6, kind: input, shape index: {}]
  %s7 = inlined_call_operand.vmem [shape: bf16[4,1,8], index: 7, kind: input, shape index: {}]
  %s8 = inlined_call_operand.vmem [shape: bf16[4,1,8], index: 8, kind: input, shape index: {}]
  %s9 = inlined_call_operand.hbm [shape: bf16[2,4,8,8], index: 9, kind: output, shape index: {0}]
  %s10 = inlined_call_operand.hbm [shape: bf16[2,4,8,8], index: 10, kind: output, shape index: {1}]
  %s11 = inlined_call_operand.hbm [shape: bf16[2,4,8,8], index: 11, kind: output, shape index: {2}]
  %12 = xla_tuple %s9, %s10, %s11
  %s13 = sld [smem:[#allocation0]]
  $region85: #{tpu_custom_call.1} parent=0
    _
  %s15 = ssub.s32 1, %s13
  %s16 = scalar_select 0, %s15, %s13
  $region1: #{tpu_custom_call.1} parent=0
    #allocation2 [shape = 'u8[4096]{0}', space=vmem, size = 0x1000, scoped, tag = 'output window, operand 0']
    #allocation3 [shape = 's32[2]{0}', space=sflag, size = 0x8, scoped, tag = 'scoped memory for tpu_custom_call.1']
    #allocation4 [shape = 'u8[4096]{0}', space=vmem, size = 0x1000, scoped, tag = 'output window, operand 1']
    #allocation5 [shape = 's32[2]{0}', space=sflag, size = 0x8, scoped, tag = 'scoped memory for tpu_custom_call.1']
    #allocation6 [shape = 'u8[4096]{0}', space=vmem, size = 0x1000, scoped, tag = 'output window, operand 2']
    %17 = vsyncpa [#allocation3], 0
    %s18 = scalar_lea.sflag [#allocation3], 1
    %19 = vsyncpa %s18, 0
    %20 = vsyncpa [#allocation5], 0
    %s21 = scalar_lea.sflag [#allocation5], 1
    %22 = vsyncpa %s21, 0
    loop: start=0, step=1, limit=10
    $region2: #{tpu_custom_call.1} parent=1 // loop_pre_header
      _
    $region3: #{tpu_custom_call.1} parent=1 // loop_header
      %s24 = sphi 0, %s28
      %p25 = scmp.ge.s32.totalorder %s24, 10
      %s31 = sphi 0, %s50
      %s32 = sphi 0, %s46
      %s33 = sphi 0, %s42
      %s34 = sphi 0, %s31
      %s35 = sphi 0, %s32
      %s36 = sphi 0, %s33
      %s37 = sphi 0, %s34
      %s38 = sphi 0, %s35
      %s39 = sphi 0, %s36
      %s55 = sphi 0, %s57
      %s58 = sphi 0, %s55
      %s59 = sphi 0, %s58
      %s75 = sphi 0, %s59
      %s83 = sphi 0, %s85
      %s86 = sphi 0, %s83
      %s87 = sphi 0, %s86
      %s103 = sphi 0, %s87
      %s111 = sphi 0, %s113
      %s114 = sphi 0, %s111
      %s115 = sphi 0, %s114
      %s131 = sphi 0, %s115
      %s137 = sphi 0, %s139
      %s140 = sphi 0, %s137
      %s141 = sphi 0, %s140
      %s157 = sphi 0, %s141
      %s163 = sphi 0, %s165
      %s166 = sphi 0, %s163
      %s167 = sphi 0, %s166
      %s183 = sphi 0, %s167
      %s189 = sphi 0, %s191
      %s192 = sphi 0, %s189
      %s193 = sphi 0, %s192
      %s209 = sphi 0, %s193
      %s215 = sphi 0, %s217
      %s218 = sphi 0, %s215
      %s219 = sphi 0, %s218
      %s235 = sphi 0, %s219
      %s241 = sphi 0, %s243
      %s244 = sphi 0, %s241
      %s245 = sphi 0, %s244
      %s261 = sphi 0, %s245
      %s267 = sphi 0, %s269
      %s270 = sphi 0, %s267
      %s271 = sphi 0, %s270
      %s287 = sphi 0, %s271
      %s297 = sphi 0, %s299
      %s300 = sphi 0, %s297
      %s301 = sphi 0, %s300
      %s317 = sphi 0, %s301
      %s327 = sphi 0, %s329
      %s330 = sphi 0, %s327
      %s331 = sphi 0, %s330
      %s347 = sphi 0, %s331
      %s357 = sphi 0, %s359
      %s360 = sphi 0, %s357
      %s361 = sphi 0, %s360
      %s377 = sphi 0, %s361
    $region4: #{tpu_custom_call.1} parent=1 // loop_header_branch
      %27 = sbr.rel (%p25) target = $region8
    $region5: #{tpu_custom_call.1} parent=1 // loop_body
      %s29 = ssub.s32 %s24, 1
      %s30 = ssub.s32 %s24, 2
      %s40 = sadd.s32 1, %s33
      %p41 = scmp.ge.s32.totalorder %s40, 4
      %s42 = scalar_select %p41, 0, %s40
      %s43 = sadd.s32 1, %s32
      %s44 = scalar_select %p41, %s43, %s32
      %p45 = scmp.ge.s32.totalorder %s44, 1
      %s46 = scalar_select %p45, 0, %s44
      %s47 = sadd.s32 1, %s31
      %s48 = scalar_select %p45, %s47, %s31
      %p49 = scmp.ge.s32.totalorder %s48, 2
      %s50 = scalar_select %p49, 0, %s48
      %s51 = ssub.s32 %s31, %s50
      %s52 = ssub.s32 %s32, %s46
      %s53 = sor.u32 %s51, %s52
      %p54 = scmp.eq.s32.totalorder %s53, 0
      %s56 = sadd.s32 %s55, 1
      %s57 = scalar_select %p54, %s55, %s56
      %p60 = pneg %p54
      %p61 = scmp.eq.s32.totalorder %s24, 7
      %p62 = por %p60, %p61
      %p63 = scmp.ne.s32.totalorder %s55, %s58
      %p64 = scmp.eq.s32.totalorder %s24, 0
      %p65 = por %p63, %p64
      %p66 = scmp.ne.s32.totalorder %s55, %s58
      %p67 = scmp.eq.s32.totalorder %s29, 7
      %p68 = por %p66, %p67
      %p69 = scmp.ne.s32.totalorder %s58, %s59
      %p70 = scmp.eq.s32.totalorder %s29, 0
      %p71 = por %p69, %p70
      %p72 = scmp.ne.s32.totalorder %s58, %s59
      %p73 = scmp.eq.s32.totalorder %s30, 7
      %p74 = por %p72, %p73
      %p76 = scmp.ne.s32.totalorder %s59, %s75
      %p77 = scmp.eq.s32.totalorder %s30, 0
      %p78 = por %p76, %p77
      %s79 = ssub.s32 %s31, %s50
      %s80 = ssub.s32 %s32, %s46
      %s81 = sor.u32 %s79, %s80
      %p82 = scmp.eq.s32.totalorder %s81, 0
      %s84 = sadd.s32 %s83, 1
      %s85 = scalar_select %p82, %s83, %s84
      %p88 = pneg %p82
      %p89 = scmp.eq.s32.totalorder %s24, 7
      %p90 = por %p88, %p89
      %p91 = scmp.ne.s32.totalorder %s83, %s86
      %p92 = scmp.eq.s32.totalorder %s24, 0
      %p93 = por %p91, %p92
      %p94 = scmp.ne.s32.totalorder %s83, %s86
      %p95 = scmp.eq.s32.totalorder %s29, 7
      %p96 = por %p94, %p95
      %p97 = scmp.ne.s32.totalorder %s86, %s87
      %p98 = scmp.eq.s32.totalorder %s29, 0
      %p99 = por %p97, %p98
      %p100 = scmp.ne.s32.totalorder %s86, %s87
      %p101 = scmp.eq.s32.totalorder %s30, 7
      %p102 = por %p100, %p101
      %p104 = scmp.ne.s32.totalorder %s87, %s103
      %p105 = scmp.eq.s32.totalorder %s30, 0
      %p106 = por %p104, %p105
      %s107 = ssub.s32 %s31, %s50
      %s108 = ssub.s32 %s32, %s46
      %s109 = sor.u32 %s107, %s108
      %p110 = scmp.eq.s32.totalorder %s109, 0
      %s112 = sadd.s32 %s111, 1
      %s113 = scalar_select %p110, %s111, %s112
      %p116 = pneg %p110
      %p117 = scmp.eq.s32.totalorder %s24, 7
      %p118 = por %p116, %p117
      %p119 = scmp.ne.s32.totalorder %s111, %s114
      %p120 = scmp.eq.s32.totalorder %s24, 0
      %p121 = por %p119, %p120
      %p122 = scmp.ne.s32.totalorder %s111, %s114
      %p123 = scmp.eq.s32.totalorder %s29, 7
      %p124 = por %p122, %p123
      %p125 = scmp.ne.s32.totalorder %s114, %s115
      %p126 = scmp.eq.s32.totalorder %s29, 0
      %p127 = por %p125, %p126
      %p128 = scmp.ne.s32.totalorder %s114, %s115
      %p129 = scmp.eq.s32.totalorder %s30, 7
      %p130 = por %p128, %p129
      %p132 = scmp.ne.s32.totalorder %s115, %s131
      %p133 = scmp.eq.s32.totalorder %s30, 0
      %p134 = por %p132, %p133
      %s135 = ssub.s32 %s33, %s42
      %p136 = scmp.eq.s32.totalorder %s135, 0
      %s138 = sadd.s32 %s137, 1
      %s139 = scalar_select %p136, %s137, %s138
      %p142 = pneg %p136
      %p143 = scmp.eq.s32.totalorder %s24, 7
      %p144 = por %p142, %p143
      %p145 = scmp.ne.s32.totalorder %s137, %s140
      %p146 = scmp.eq.s32.totalorder %s24, 0
      %p147 = por %p145, %p146
      %p148 = scmp.ne.s32.totalorder %s137, %s140
      %p149 = scmp.eq.s32.totalorder %s29, 7
      %p150 = por %p148, %p149
      %p151 = scmp.ne.s32.totalorder %s140, %s141
      %p152 = scmp.eq.s32.totalorder %s29, 0
      %p153 = por %p151, %p152
      %p154 = scmp.ne.s32.totalorder %s140, %s141
      %p155 = scmp.eq.s32.totalorder %s30, 7
      %p156 = por %p154, %p155
      %p158 = scmp.ne.s32.totalorder %s141, %s157
      %p159 = scmp.eq.s32.totalorder %s30, 0
      %p160 = por %p158, %p159
      %s161 = ssub.s32 %s33, %s42
      %p162 = scmp.eq.s32.totalorder %s161, 0
      %s164 = sadd.s32 %s163, 1
      %s165 = scalar_select %p162, %s163, %s164
      %p168 = pneg %p162
      %p169 = scmp.eq.s32.totalorder %s24, 7
      %p170 = por %p168, %p169
      %p171 = scmp.ne.s32.totalorder %s163, %s166
      %p172 = scmp.eq.s32.totalorder %s24, 0
      %p173 = por %p171, %p172
      %p174 = scmp.ne.s32.totalorder %s163, %s166
      %p175 = scmp.eq.s32.totalorder %s29, 7
      %p176 = por %p174, %p175
      %p177 = scmp.ne.s32.totalorder %s166, %s167
      %p178 = scmp.eq.s32.totalorder %s29, 0
      %p179 = por %p177, %p178
      %p180 = scmp.ne.s32.totalorder %s166, %s167
      %p181 = scmp.eq.s32.totalorder %s30, 7
      %p182 = por %p180, %p181
      %p184 = scmp.ne.s32.totalorder %s167, %s183
      %p185 = scmp.eq.s32.totalorder %s30, 0
      %p186 = por %p184, %p185
      %s187 = ssub.s32 %s33, %s42
      %p188 = scmp.eq.s32.totalorder %s187, 0
      %s190 = sadd.s32 %s189, 1
      %s191 = scalar_select %p188, %s189, %s190
      %p194 = pneg %p188
      %p195 = scmp.eq.s32.totalorder %s24, 7
      %p196 = por %p194, %p195
      %p197 = scmp.ne.s32.totalorder %s189, %s192
      %p198 = scmp.eq.s32.totalorder %s24, 0
      %p199 = por %p197, %p198
      %p200 = scmp.ne.s32.totalorder %s189, %s192
      %p201 = scmp.eq.s32.totalorder %s29, 7
      %p202 = por %p200, %p201
      %p203 = scmp.ne.s32.totalorder %s192, %s193
      %p204 = scmp.eq.s32.totalorder %s29, 0
      %p205 = por %p203, %p204
      %p206 = scmp.ne.s32.totalorder %s192, %s193
      %p207 = scmp.eq.s32.totalorder %s30, 7
      %p208 = por %p206, %p207
      %p210 = scmp.ne.s32.totalorder %s193, %s209
      %p211 = scmp.eq.s32.totalorder %s30, 0
      %p212 = por %p210, %p211
      %s213 = ssub.s32 %s33, %s42
      %p214 = scmp.eq.s32.totalorder %s213, 0
      %s216 = sadd.s32 %s215, 1
      %s217 = scalar_select %p214, %s215, %s216
      %p220 = pneg %p214
      %p221 = scmp.eq.s32.totalorder %s24, 7
      %p222 = por %p220, %p221
      %p223 = scmp.ne.s32.totalorder %s215, %s218
      %p224 = scmp.eq.s32.totalorder %s24, 0
      %p225 = por %p223, %p224
      %p226 = scmp.ne.s32.totalorder %s215, %s218
      %p227 = scmp.eq.s32.totalorder %s29, 7
      %p228 = por %p226, %p227
      %p229 = scmp.ne.s32.totalorder %s218, %s219
      %p230 = scmp.eq.s32.totalorder %s29, 0
      %p231 = por %p229, %p230
      %p232 = scmp.ne.s32.totalorder %s218, %s219
      %p233 = scmp.eq.s32.totalorder %s30, 7
      %p234 = por %p232, %p233
      %p236 = scmp.ne.s32.totalorder %s219, %s235
      %p237 = scmp.eq.s32.totalorder %s30, 0
      %p238 = por %p236, %p237
      %s239 = ssub.s32 %s33, %s42
      %p240 = scmp.eq.s32.totalorder %s239, 0
      %s242 = sadd.s32 %s241, 1
      %s243 = scalar_select %p240, %s241, %s242
      %p246 = pneg %p240
      %p247 = scmp.eq.s32.totalorder %s24, 7
      %p248 = por %p246, %p247
      %p249 = scmp.ne.s32.totalorder %s241, %s244
      %p250 = scmp.eq.s32.totalorder %s24, 0
      %p251 = por %p249, %p250
      %p252 = scmp.ne.s32.totalorder %s241, %s244
      %p253 = scmp.eq.s32.totalorder %s29, 7
      %p254 = por %p252, %p253
      %p255 = scmp.ne.s32.totalorder %s244, %s245
      %p256 = scmp.eq.s32.totalorder %s29, 0
      %p257 = por %p255, %p256
      %p258 = scmp.ne.s32.totalorder %s244, %s245
      %p259 = scmp.eq.s32.totalorder %s30, 7
      %p260 = por %p258, %p259
      %p262 = scmp.ne.s32.totalorder %s245, %s261
      %p263 = scmp.eq.s32.totalorder %s30, 0
      %p264 = por %p262, %p263
      %s265 = ssub.s32 %s33, %s42
      %p266 = scmp.eq.s32.totalorder %s265, 0
      %s268 = sadd.s32 %s267, 1
      %s269 = scalar_select %p266, %s267, %s268
      %p272 = pneg %p266
      %p273 = scmp.eq.s32.totalorder %s24, 7
      %p274 = por %p272, %p273
      %p275 = scmp.ne.s32.totalorder %s267, %s270
      %p276 = scmp.eq.s32.totalorder %s24, 0
      %p277 = por %p275, %p276
      %p278 = scmp.ne.s32.totalorder %s267, %s270
      %p279 = scmp.eq.s32.totalorder %s29, 7
      %p280 = por %p278, %p279
      %p281 = scmp.ne.s32.totalorder %s270, %s271
      %p282 = scmp.eq.s32.totalorder %s29, 0
      %p283 = por %p281, %p282
      %p284 = scmp.ne.s32.totalorder %s270, %s271
      %p285 = scmp.eq.s32.totalorder %s30, 7
      %p286 = por %p284, %p285
      %p288 = scmp.ne.s32.totalorder %s271, %s287
      %p289 = scmp.eq.s32.totalorder %s30, 0
      %p290 = por %p288, %p289
      %s291 = ssub.s32 %s31, %s50
      %s292 = ssub.s32 %s33, %s42
      %s293 = sor.u32 %s291, %s292
      %s294 = ssub.s32 %s32, %s46
      %s295 = sor.u32 %s293, %s294
      %p296 = scmp.eq.s32.totalorder %s295, 0
      %s298 = sadd.s32 %s297, 1
      %s299 = scalar_select %p296, %s297, %s298
      %p302 = pneg %p296
      %p303 = scmp.eq.s32.totalorder %s24, 7
      %p304 = por %p302, %p303
      %p305 = scmp.ne.s32.totalorder %s297, %s300
      %p306 = scmp.eq.s32.totalorder %s24, 0
      %p307 = por %p305, %p306
      %p308 = scmp.ne.s32.totalorder %s297, %s300
      %p309 = scmp.eq.s32.totalorder %s29, 7
      %p310 = por %p308, %p309
      %p311 = scmp.ne.s32.totalorder %s300, %s301
      %p312 = scmp.eq.s32.totalorder %s29, 0
      %p313 = por %p311, %p312
      %p314 = scmp.ne.s32.totalorder %s300, %s301
      %p315 = scmp.eq.s32.totalorder %s30, 7
      %p316 = por %p314, %p315
      %p318 = scmp.ne.s32.totalorder %s301, %s317
      %p319 = scmp.eq.s32.totalorder %s30, 0
      %p320 = por %p318, %p319
      %s321 = ssub.s32 %s31, %s50
      %s322 = ssub.s32 %s33, %s42
      %s323 = sor.u32 %s321, %s322
      %s324 = ssub.s32 %s32, %s46
      %s325 = sor.u32 %s323, %s324
      %p326 = scmp.eq.s32.totalorder %s325, 0
      %s328 = sadd.s32 %s327, 1
      %s329 = scalar_select %p326, %s327, %s328
      %p332 = pneg %p326
      %p333 = scmp.eq.s32.totalorder %s24, 7
      %p334 = por %p332, %p333
      %p335 = scmp.ne.s32.totalorder %s327, %s330
      %p336 = scmp.eq.s32.totalorder %s24, 0
      %p337 = por %p335, %p336
      %p338 = scmp.ne.s32.totalorder %s327, %s330
      %p339 = scmp.eq.s32.totalorder %s29, 7
      %p340 = por %p338, %p339
      %p341 = scmp.ne.s32.totalorder %s330, %s331
      %p342 = scmp.eq.s32.totalorder %s29, 0
      %p343 = por %p341, %p342
      %p344 = scmp.ne.s32.totalorder %s330, %s331
      %p345 = scmp.eq.s32.totalorder %s30, 7
      %p346 = por %p344, %p345
      %p348 = scmp.ne.s32.totalorder %s331, %s347
      %p349 = scmp.eq.s32.totalorder %s30, 0
      %p350 = por %p348, %p349
      %s351 = ssub.s32 %s31, %s50
      %s352 = ssub.s32 %s33, %s42
      %s353 = sor.u32 %s351, %s352
      %s354 = ssub.s32 %s32, %s46
      %s355 = sor.u32 %s353, %s354
      %p356 = scmp.eq.s32.totalorder %s355, 0
      %s358 = sadd.s32 %s357, 1
      %s359 = scalar_select %p356, %s357, %s358
      %p362 = pneg %p356
      %p363 = scmp.eq.s32.totalorder %s24, 7
      %p364 = por %p362, %p363
      %p365 = scmp.ne.s32.totalorder %s357, %s360
      %p366 = scmp.eq.s32.totalorder %s24, 0
      %p367 = por %p365, %p366
      %p368 = scmp.ne.s32.totalorder %s357, %s360
      %p369 = scmp.eq.s32.totalorder %s29, 7
      %p370 = por %p368, %p369
      %p371 = scmp.ne.s32.totalorder %s360, %s361
      %p372 = scmp.eq.s32.totalorder %s29, 0
      %p373 = por %p371, %p372
      %p374 = scmp.ne.s32.totalorder %s360, %s361
      %p375 = scmp.eq.s32.totalorder %s30, 7
      %p376 = por %p374, %p375
      %p378 = scmp.ne.s32.totalorder %s361, %s377
      %p379 = scmp.eq.s32.totalorder %s30, 0
      %p380 = por %p378, %p379
      %p381 = scmp.le.s32.totalorder 1, %s24
      %p382 = scmp.lt.s32.totalorder %s24, 9
      %p383 = pnand %p381, %p382
      %p384 = pneg %p383
      // Predicated region
      $region9: #{tpu_custom_call.1} parent=5 // pred_check
        _
      $region10: #{tpu_custom_call.1} parent=5 // pred_check_branch
        %386 = sbr.rel (%p383) target = $region12
      $region11: #{tpu_custom_call.1} parent=5 // pred_region
        %s387 = ssub.s32 %s24, 1
      $region12: #{tpu_custom_call.1} parent=5 // pred_fallthru
        _
      %p388 = scmp.lt.s32.totalorder %s24, 8
      // Predicated region
      $region13: #{tpu_custom_call.1} parent=5 // pred_check
        %p389 = pneg %p388
      $region14: #{tpu_custom_call.1} parent=5 // pred_check_branch
        %391 = sbr.rel (%p389) target = $region16
      $region15: #{tpu_custom_call.1} parent=5 // pred_region
        // Predicated region
        $region17: #{tpu_custom_call.1} parent=15 // pred_check
          %p392 = pneg %p65
        $region18: #{tpu_custom_call.1} parent=15 // pred_check_branch
          %394 = sbr.rel (%p392) target = $region20
        $region19: #{tpu_custom_call.1} parent=15 // pred_region
          %p395 = scmp.lt.s32.totalorder %s31, 1
          %s396 = scalar_select %p395, %s31, 1
          %p397 = scmp.lt.s32.totalorder %s32, 0
          %s398 = scalar_select %p397, %s32, 0
          %s399 = sadd.s32 %s398, %s396
          %s400 = smul.addr %s399, 4
          %s401 = scalar_lea.vmem %s0, %s400
        $region20: #{tpu_custom_call.1} parent=15 // pred_fallthru
          _
        // Predicated region
        $region21: #{tpu_custom_call.1} parent=15 // pred_check
          %p402 = pneg %p93
        $region22: #{tpu_custom_call.1} parent=15 // pred_check_branch
          %404 = sbr.rel (%p402) target = $region24
        $region23: #{tpu_custom_call.1} parent=15 // pred_region
          %p405 = scmp.lt.s32.totalorder %s31, 1
          %s406 = scalar_select %p405, %s31, 1
          %p407 = scmp.lt.s32.totalorder %s32, 0
          %s408 = scalar_select %p407, %s32, 0
          %s409 = sadd.s32 %s408, %s406
          %s410 = smul.addr %s409, 4
          %s411 = scalar_lea.vmem %s1, %s410
        $region24: #{tpu_custom_call.1} parent=15 // pred_fallthru
          _
        // Predicated region
        $region25: #{tpu_custom_call.1} parent=15 // pred_check
          %p412 = pneg %p121
        $region26: #{tpu_custom_call.1} parent=15 // pred_check_branch
          %414 = sbr.rel (%p412) target = $region28
        $region27: #{tpu_custom_call.1} parent=15 // pred_region
          %p415 = scmp.lt.s32.totalorder %s31, 1
          %s416 = scalar_select %p415, %s31, 1
          %p417 = scmp.lt.s32.totalorder %s32, 0
          %s418 = scalar_select %p417, %s32, 0
          %s419 = sadd.s32 %s418, %s416
          %s420 = smul.addr %s419, 4
          %s421 = scalar_lea.vmem %s2, %s420
        $region28: #{tpu_custom_call.1} parent=15 // pred_fallthru
          _
        // Predicated region
        $region29: #{tpu_custom_call.1} parent=15 // pred_check
          %p422 = pneg %p147
        $region30: #{tpu_custom_call.1} parent=15 // pred_check_branch
          %424 = sbr.rel (%p422) target = $region32
        $region31: #{tpu_custom_call.1} parent=15 // pred_region
          %p425 = scmp.lt.s32.totalorder %s33, 3
          %s426 = scalar_select %p425, %s33, 3
          %s427 = smul.addr %s426, 4
          %s428 = smul.addr %s427, 4
          %s429 = scalar_lea.vmem %s3, %s428
        $region32: #{tpu_custom_call.1} parent=15 // pred_fallthru
          _
        // Predicated region
        $region33: #{tpu_custom_call.1} parent=15 // pred_check
          %p430 = pneg %p173
        $region34: #{tpu_custom_call.1} parent=15 // pred_check_branch
          %432 = sbr.rel (%p430) target = $region36
        $region35: #{tpu_custom_call.1} parent=15 // pred_region
          %p433 = scmp.lt.s32.totalorder %s33, 3
          %s434 = scalar_select %p433, %s33, 3
          %s435 = smul.addr %s434, 4
          %s436 = smul.addr %s435, 4
          %s437 = scalar_lea.vmem %s4, %s436
        $region36: #{tpu_custom_call.1} parent=15 // pred_fallthru
          _
        // Predicated region
        $region37: #{tpu_custom_call.1} parent=15 // pred_check
          %p438 = pneg %p199
        $region38: #{tpu_custom_call.1} parent=15 // pred_check_branch
          %440 = sbr.rel (%p438) target = $region40
        $region39: #{tpu_custom_call.1} parent=15 // pred_region
          %p441 = scmp.lt.s32.totalorder %s33, 3
          %s442 = scalar_select %p441, %s33, 3
          %s443 = smul.addr %s442, 4
          %s444 = smul.addr %s443, 4
          %s445 = scalar_lea.vmem %s5, %s444
        $region40: #{tpu_custom_call.1} parent=15 // pred_fallthru
          _
        // Predicated region
        $region41: #{tpu_custom_call.1} parent=15 // pred_check
          %p446 = pneg %p225
        $region42: #{tpu_custom_call.1} parent=15 // pred_check_branch
          %448 = sbr.rel (%p446) target = $region44
        $region43: #{tpu_custom_call.1} parent=15 // pred_region
          %p449 = scmp.lt.s32.totalorder %s33, 3
          %s450 = scalar_select %p449, %s33, 3
          %s451 = scalar_lea.vmem %s6, %s450
        $region44: #{tpu_custom_call.1} parent=15 // pred_fallthru
          _
        // Predicated region
        $region45: #{tpu_custom_call.1} parent=15 // pred_check
          %p452 = pneg %p251
        $region46: #{tpu_custom_call.1} parent=15 // pred_check_branch
          %454 = sbr.rel (%p452) target = $region48
        $region47: #{tpu_custom_call.1} parent=15 // pred_region
          %p455 = scmp.lt.s32.totalorder %s33, 3
          %s456 = scalar_select %p455, %s33, 3
          %s457 = scalar_lea.vmem %s7, %s456
        $region48: #{tpu_custom_call.1} parent=15 // pred_fallthru
          _
        // Predicated region
        $region49: #{tpu_custom_call.1} parent=15 // pred_check
          %p458 = pneg %p277
        $region50: #{tpu_custom_call.1} parent=15 // pred_check_branch
          %460 = sbr.rel (%p458) target = $region52
        $region51: #{tpu_custom_call.1} parent=15 // pred_region
          %p461 = scmp.lt.s32.totalorder %s33, 3
          %s462 = scalar_select %p461, %s33, 3
          %s463 = scalar_lea.vmem %s8, %s462
        $region52: #{tpu_custom_call.1} parent=15 // pred_fallthru
          _
      $region16: #{tpu_custom_call.1} parent=5 // pred_fallthru
        _
      %p464 = scmp.le.s32.totalorder 1, %s24
      %p465 = scmp.lt.s32.totalorder %s24, 9
      %p466 = pnand %p464, %p465
      %p467 = pneg %p466
      // Predicated region
      $region53: #{tpu_custom_call.1} parent=5 // pred_check
        _
      $region54: #{tpu_custom_call.1} parent=5 // pred_check_branch
        %469 = sbr.rel (%p466) target = $region56
      $region55: #{tpu_custom_call.1} parent=5 // pred_region
        %s470 = ssub.s32 %s24, 1
        %p471 = scmp.lt.s32.totalorder %s34, 1
        %s472 = scalar_select %p471, %s34, 1
        %p473 = scmp.lt.s32.totalorder %s35, 0
        %s474 = scalar_select %p473, %s35, 0
        %s475 = sadd.s32 %s474, %s472
        %s476 = smul.addr %s475, 4
        %s477 = scalar_lea.vmem %s0, %s476
        %p478 = pneg %p71
        %p479 = pneg %p68
        %p480 = scmp.lt.s32.totalorder %s34, 1
        %s481 = scalar_select %p480, %s34, 1
        %p482 = scmp.lt.s32.totalorder %s35, 0
        %s483 = scalar_select %p482, %s35, 0
        %s484 = sadd.s32 %s483, %s481
        %s485 = smul.addr %s484, 4
        %s486 = scalar_lea.vmem %s1, %s485
        %p487 = pneg %p99
        %p488 = pneg %p96
        %p489 = scmp.lt.s32.totalorder %s34, 1
        %s490 = scalar_select %p489, %s34, 1
        %p491 = scmp.lt.s32.totalorder %s35, 0
        %s492 = scalar_select %p491, %s35, 0
        %s493 = sadd.s32 %s492, %s490
        %s494 = smul.addr %s493, 4
        %s495 = scalar_lea.vmem %s2, %s494
        %p496 = pneg %p127
        %p497 = pneg %p124
        %p498 = scmp.lt.s32.totalorder %s36, 3
        %s499 = scalar_select %p498, %s36, 3
        %s500 = smul.addr %s499, 4
        %s501 = smul.addr %s500, 4
        %s502 = scalar_lea.vmem %s3, %s501
        %p503 = pneg %p153
        %p504 = pneg %p150
        %p505 = scmp.lt.s32.totalorder %s36, 3
        %s506 = scalar_select %p505, %s36, 3
        %s507 = smul.addr %s506, 4
        %s508 = smul.addr %s507, 4
        %s509 = scalar_lea.vmem %s4, %s508
        %p510 = pneg %p179
        %p511 = pneg %p176
        %p512 = scmp.lt.s32.totalorder %s36, 3
        %s513 = scalar_select %p512, %s36, 3
        %s514 = smul.addr %s513, 4
        %s515 = smul.addr %s514, 4
        %s516 = scalar_lea.vmem %s5, %s515
        %p517 = pneg %p205
        %p518 = pneg %p202
        %p519 = scmp.lt.s32.totalorder %s36, 3
        %s520 = scalar_select %p519, %s36, 3
        %s521 = scalar_lea.vmem %s6, %s520
        %p522 = pneg %p231
        %p523 = pneg %p228
        %p524 = scmp.lt.s32.totalorder %s36, 3
        %s525 = scalar_select %p524, %s36, 3
        %s526 = scalar_lea.vmem %s7, %s525
        %p527 = pneg %p257
        %p528 = pneg %p254
        %p529 = scmp.lt.s32.totalorder %s36, 3
        %s530 = scalar_select %p529, %s36, 3
        %s531 = scalar_lea.vmem %s8, %s530
        %p532 = pneg %p283
        %p533 = pneg %p280
        %p534 = pneg %p313
        %p535 = pneg %p310
        %s536 = sand.u32 %s300, 1
        %s537 = scalar_lea.sflag [#allocation3], %s536
        %s538 = sand.u32 %s300, 1
        %s539 = smul.addr %s538, 4
        %s540 = scalar_lea.vmem [#allocation2], %s539
        %p541 = pneg %p343
        %p542 = pneg %p340
        %s543 = sand.u32 %s29, 1
        %s544 = scalar_lea.sflag [#allocation5], %s543
        %s545 = sand.u32 %s330, 1
        %s546 = smul.addr %s545, 4
        %s547 = scalar_lea.vmem [#allocation4], %s546
        %p548 = pneg %p373
        %p549 = pneg %p370
        %s550 = sand.u32 %s29, 1
        %s551 = scalar_lea.sflag [#allocation5], %s550
        %s552 = sand.u32 %s360, 1
        %s553 = smul.addr %s552, 4
        %s554 = scalar_lea.vmem [#allocation6], %s553
        %p555 = scmp.lt.s32.totalorder %s34, 1
        %s556 = scalar_select %p555, %s34, 1
        %p557 = scmp.lt.s32.totalorder %s35, 0
        %s558 = scalar_select %p557, %s35, 0
        %s559 = sadd.s32 %s558, %s556
        %s560 = smul.addr %s559, 4
        %s561 = scalar_lea.vmem %s0, %s560
        %p562 = scmp.lt.s32.totalorder %s34, 1
        %s563 = scalar_select %p562, %s34, 1
        %p564 = scmp.lt.s32.totalorder %s35, 0
        %s565 = scalar_select %p564, %s35, 0
        %s566 = sadd.s32 %s565, %s563
        %s567 = smul.addr %s566, 4
        %s568 = scalar_lea.vmem %s1, %s567
        %p569 = scmp.lt.s32.totalorder %s34, 1
        %s570 = scalar_select %p569, %s34, 1
        %p571 = scmp.lt.s32.totalorder %s35, 0
        %s572 = scalar_select %p571, %s35, 0
        %s573 = sadd.s32 %s572, %s570
        %s574 = smul.addr %s573, 4
        %s575 = scalar_lea.vmem %s2, %s574
        %p576 = scmp.lt.s32.totalorder %s36, 3
        %s577 = scalar_select %p576, %s36, 3
        %s578 = smul.addr %s577, 4
        %s579 = smul.addr %s578, 4
        %s580 = scalar_lea.vmem %s3, %s579
        %p581 = scmp.lt.s32.totalorder %s36, 3
        %s582 = scalar_select %p581, %s36, 3
        %s583 = smul.addr %s582, 4
        %s584 = smul.addr %s583, 4
        %s585 = scalar_lea.vmem %s4, %s584
        %p586 = scmp.lt.s32.totalorder %s36, 3
        %s587 = scalar_select %p586, %s36, 3
        %s588 = smul.addr %s587, 4
        %s589 = smul.addr %s588, 4
        %s590 = scalar_lea.vmem %s5, %s589
        %p591 = scmp.lt.s32.totalorder %s36, 3
        %s592 = scalar_select %p591, %s36, 3
        %s593 = scalar_lea.vmem %s6, %s592
        %p594 = scmp.lt.s32.totalorder %s36, 3
        %s595 = scalar_select %p594, %s36, 3
        %s596 = scalar_lea.vmem %s7, %s595
        %p597 = scmp.lt.s32.totalorder %s36, 3
        %s598 = scalar_select %p597, %s36, 3
        %s599 = scalar_lea.vmem %s8, %s598
        %v601 = vld [vmem:[%s561] sm:$0xf]
        %v602 = vld [vmem:[%s580] sm:$0xf]
        %v603 = vld [vmem:[%s580 + $0x4] sm:$0xf]
        %v604 = vld [vmem:[%s580 + $0x8] sm:$0xf]
        %v605 = vld [vmem:[%s580 + $0xc] sm:$0xf]
        %v606 = vld [vmem:[%s593] sm:$0x1]
        %v607 = vunpack.c.l.bf16 %v606
        %v608 = vlaneseq
        %v609 = vshrl.u32 %v608, 7
        %v610 = vsub.s32 0, %v609
        %v611 = vrot.slane %v607, %v610
        %v616 = vunpack.c.l.b16 %v602
        %v617 = vunpack.c.l.b16 %v603
        %v618 = vunpack.c.l.b16 %v604
        %v619 = vunpack.c.l.b16 %v605
        %v620 = vpack.c.b16 %v617, %v616
        %v621 = vpack.c.b16 %v619, %v618
        %vm624 = vcmask 261120
        %v626 = vsel %vm624, %v601, 0
        %628 = vmatprep.subr.bf16.mxu0 0
        %629 = vmatpush1.bf16.msra.mxu0 %v620
        %630 = vmatprep.subr.bf16.mxu0 0
        %631 = vmatpush1.bf16.msra.mxu0 %v621
        %632 = vmatprep.subr.bf16.mxu0 0
        %633 = vmatpush1.bf16.msra.mxu0 0
        %634 = vmatprep.subr.bf16.mxu0 0
        %635 = vmatpush1.bf16.msra.mxu0 0
        %636 = vmatprep.subr.bf16.mxu0 0
        %637 = vmatpush1.bf16.msra.mxu0 0
        %638 = vmatprep.subr.bf16.mxu0 0
        %639 = vmatpush1.bf16.msra.mxu0 0
        %640 = vmatprep.subr.bf16.mxu0 0
        %641 = vmatpush1.bf16.msra.mxu0 0
        %642 = vmatprep.subr.bf16.mxu0 0
        %643 = vmatpush1.bf16.msra.mxu0 0
        %644 = vmatprep.subr.bf16.mxu0 0
        %645 = vmatpush1.bf16.msra.mxu0 0
        %646 = vmatprep.subr.bf16.mxu0 0
        %647 = vmatpush1.bf16.msra.mxu0 0
        %648 = vmatprep.subr.bf16.mxu0 0
        %649 = vmatpush1.bf16.msra.mxu0 0
        %650 = vmatprep.subr.bf16.mxu0 0
        %651 = vmatpush1.bf16.msra.mxu0 0
        %652 = vmatprep.subr.bf16.mxu0 0
        %653 = vmatpush1.bf16.msra.mxu0 0
        %654 = vmatprep.subr.bf16.mxu0 0
        %655 = vmatpush1.bf16.msra.mxu0 0
        %656 = vmatprep.subr.bf16.mxu0 0
        %657 = vmatpush1.bf16.msra.mxu0 0
        %658 = vmatprep.subr.bf16.mxu0 0
        %659 = vmatpush1.bf16.msra.mxu0 0
        %660 = vmatprep.mubr.bf16.mxu0 0
        %661 = vmatmul.mubr.bf16.gmra.mrb[0].mxu0 %v626
        %v662 = vpop.f32.mrb[0].mxu0
        %v663 = vadd.f32 %v611, %v662
        %v664 = vpop.f32.mrb[0].mxu0
        %v665 = vpop.f32.mrb[0].mxu0
        %v666 = vpop.f32.mrb[0].mxu0
        %667 = vdwg.mxu0
        %v668 = vpack.c.bf16 %v663, %v663
        %vm669 = vcmask 60416
        %670 = vst.msk [vmem:[%s540] sm:$0xf] %vm669, %v668
        %v671 = vld [vmem:[%s568] sm:$0xf]
        %v672 = vld [vmem:[%s585] sm:$0xf]
        %v673 = vld [vmem:[%s585 + $0x4] sm:$0xf]
        %v674 = vld [vmem:[%s585 + $0x8] sm:$0xf]
        %v675 = vld [vmem:[%s585 + $0xc] sm:$0xf]
        %v676 = vld [vmem:[%s596] sm:$0x1]
        %v677 = vunpack.c.l.bf16 %v676
        %v678 = vlaneseq
        %v679 = vshrl.u32 %v678, 7
        %v680 = vsub.s32 0, %v679
        %v681 = vrot.slane %v677, %v680
        %v686 = vunpack.c.l.b16 %v672
        %v687 = vunpack.c.l.b16 %v673
        %v688 = vunpack.c.l.b16 %v674
        %v689 = vunpack.c.l.b16 %v675
        %v690 = vpack.c.b16 %v687, %v686
        %v691 = vpack.c.b16 %v689, %v688
        %v695 = vsel %vm624, %v671, 0
        %697 = vmatprep.subr.bf16.mxu0 0
        %698 = vmatpush1.bf16.msra.mxu0 %v690
        %699 = vmatprep.subr.bf16.mxu0 0
        %700 = vmatpush1.bf16.msra.mxu0 %v691
        %701 = vmatprep.subr.bf16.mxu0 0
        %702 = vmatpush1.bf16.msra.mxu0 0
        %703 = vmatprep.subr.bf16.mxu0 0
        %704 = vmatpush1.bf16.msra.mxu0 0
        %705 = vmatprep.subr.bf16.mxu0 0
        %706 = vmatpush1.bf16.msra.mxu0 0
        %707 = vmatprep.subr.bf16.mxu0 0
        %708 = vmatpush1.bf16.msra.mxu0 0
        %709 = vmatprep.subr.bf16.mxu0 0
        %710 = vmatpush1.bf16.msra.mxu0 0
        %711 = vmatprep.subr.bf16.mxu0 0
        %712 = vmatpush1.bf16.msra.mxu0 0
        %713 = vmatprep.subr.bf16.mxu0 0
        %714 = vmatpush1.bf16.msra.mxu0 0
        %715 = vmatprep.subr.bf16.mxu0 0
        %716 = vmatpush1.bf16.msra.mxu0 0
        %717 = vmatprep.subr.bf16.mxu0 0
        %718 = vmatpush1.bf16.msra.mxu0 0
        %719 = vmatprep.subr.bf16.mxu0 0
        %720 = vmatpush1.bf16.msra.mxu0 0
        %721 = vmatprep.subr.bf16.mxu0 0
        %722 = vmatpush1.bf16.msra.mxu0 0
        %723 = vmatprep.subr.bf16.mxu0 0
        %724 = vmatpush1.bf16.msra.mxu0 0
        %725 = vmatprep.subr.bf16.mxu0 0
        %726 = vmatpush1.bf16.msra.mxu0 0
        %727 = vmatprep.subr.bf16.mxu0 0
        %728 = vmatpush1.bf16.msra.mxu0 0
        %729 = vmatprep.mubr.bf16.mxu0 0
        %730 = vmatmul.mubr.bf16.gmra.mrb[0].mxu0 %v695
        %v731 = vpop.f32.mrb[0].mxu0
        %v732 = vadd.f32 %v681, %v731
        %v733 = vpop.f32.mrb[0].mxu0
        %v734 = vpop.f32.mrb[0].mxu0
        %v735 = vpop.f32.mrb[0].mxu0
        %736 = vdwg.mxu0
        %v737 = vpack.c.bf16 %v732, %v732
        %738 = vst.msk [vmem:[%s547] sm:$0xf] %vm669, %v737
        %v739 = vld [vmem:[%s575] sm:$0xf]
        %v740 = vld [vmem:[%s590] sm:$0xf]
        %v741 = vld [vmem:[%s590 + $0x4] sm:$0xf]
        %v742 = vld [vmem:[%s590 + $0x8] sm:$0xf]
        %v743 = vld [vmem:[%s590 + $0xc] sm:$0xf]
        %v744 = vld [vmem:[%s599] sm:$0x1]
        %v745 = vunpack.c.l.bf16 %v744
        %v746 = vlaneseq
        %v747 = vshrl.u32 %v746, 7
        %v748 = vsub.s32 0, %v747
        %v749 = vrot.slane %v745, %v748
        %v754 = vunpack.c.l.b16 %v740
        %v755 = vunpack.c.l.b16 %v741
        %v756 = vunpack.c.l.b16 %v742
        %v757 = vunpack.c.l.b16 %v743
        %v758 = vpack.c.b16 %v755, %v754
        %v759 = vpack.c.b16 %v757, %v756
        %v763 = vsel %vm624, %v739, 0
        %765 = vmatprep.subr.bf16.mxu0 0
        %766 = vmatpush1.bf16.msra.mxu0 %v758
        %767 = vmatprep.subr.bf16.mxu0 0
        %768 = vmatpush1.bf16.msra.mxu0 %v759
        %769 = vmatprep.subr.bf16.mxu0 0
        %770 = vmatpush1.bf16.msra.mxu0 0
        %771 = vmatprep.subr.bf16.mxu0 0
        %772 = vmatpush1.bf16.msra.mxu0 0
        %773 = vmatprep.subr.bf16.mxu0 0
        %774 = vmatpush1.bf16.msra.mxu0 0
        %775 = vmatprep.subr.bf16.mxu0 0
        %776 = vmatpush1.bf16.msra.mxu0 0
        %777 = vmatprep.subr.bf16.mxu0 0
        %778 = vmatpush1.bf16.msra.mxu0 0
        %779 = vmatprep.subr.bf16.mxu0 0
        %780 = vmatpush1.bf16.msra.mxu0 0
        %781 = vmatprep.subr.bf16.mxu0 0
        %782 = vmatpush1.bf16.msra.mxu0 0
        %783 = vmatprep.subr.bf16.mxu0 0
        %784 = vmatpush1.bf16.msra.mxu0 0
        %785 = vmatprep.subr.bf16.mxu0 0
        %786 = vmatpush1.bf16.msra.mxu0 0
        %787 = vmatprep.subr.bf16.mxu0 0
        %788 = vmatpush1.bf16.msra.mxu0 0
        %789 = vmatprep.subr.bf16.mxu0 0
        %790 = vmatpush1.bf16.msra.mxu0 0
        %791 = vmatprep.subr.bf16.mxu0 0
        %792 = vmatpush1.bf16.msra.mxu0 0
        %793 = vmatprep.subr.bf16.mxu0 0
        %794 = vmatpush1.bf16.msra.mxu0 0
        %795 = vmatprep.subr.bf16.mxu0 0
        %796 = vmatpush1.bf16.msra.mxu0 0
        %797 = vmatprep.mubr.bf16.mxu0 0
        %798 = vmatmul.mubr.bf16.gmra.mrb[0].mxu0 %v763
        %v799 = vpop.f32.mrb[0].mxu0
        %v800 = vadd.f32 %v749, %v799
        %v801 = vpop.f32.mrb[0].mxu0
        %v802 = vpop.f32.mrb[0].mxu0
        %v803 = vpop.f32.mrb[0].mxu0
        %804 = vdwg.mxu0
        %v805 = vpack.c.bf16 %v800, %v800
        %806 = vst.msk [vmem:[%s554] sm:$0xf] %vm669, %v805
        %s807 = sand.u32 %s300, 1
        %s808 = scalar_lea.sflag [#allocation3], %s807
        %s809 = sand.u32 %s300, 1
        %s810 = smul.addr %s809, 4
        %s811 = scalar_lea.vmem [#allocation2], %s810
        %s812 = sand.u32 %s29, 1
        %s813 = scalar_lea.sflag [#allocation5], %s812
        %s814 = sand.u32 %s330, 1
        %s815 = smul.addr %s814, 4
        %s816 = scalar_lea.vmem [#allocation4], %s815
        %s817 = sand.u32 %s29, 1
        %s818 = scalar_lea.sflag [#allocation5], %s817
        %s819 = sand.u32 %s360, 1
        %s820 = smul.addr %s819, 4
        %s821 = scalar_lea.vmem [#allocation6], %s820
        // Predicated region
        $region57: #{tpu_custom_call.1} parent=55 // pred_check
          %p822 = pneg %p310
        $region58: #{tpu_custom_call.1} parent=55 // pred_check_branch
          %824 = sbr.rel (%p822) target = $region60
        $region59: #{tpu_custom_call.1} parent=55 // pred_region
          %s826 = ssub.s32 64, 64
          %827 = vsyncadd %s808, %s826
          %s828 = sadd.s32 %s35, %s36
          %s829 = smul.addr %s34, 4
          %s830 = sadd.s32 %s828, %s829
          %s831 = smul.addr %s830, 64
          %s832 = scalar_lea.hbm %s9, %s831
          %s834 = sshll.u32 %s811, 4
          %s835 = int_to_ptr.vmem [resolvable:$true] %s834
          %837 = dma.vmem_to_hbm [thread:$0]  %s835, 64, %s832, %s808
        $region60: #{tpu_custom_call.1} parent=55 // pred_fallthru
          _
        // Predicated region
        $region61: #{tpu_custom_call.1} parent=55 // pred_check
          %p838 = pneg %p340
        $region62: #{tpu_custom_call.1} parent=55 // pred_check_branch
          %840 = sbr.rel (%p838) target = $region64
        $region63: #{tpu_custom_call.1} parent=55 // pred_region
          %s842 = ssub.s32 64, 64
          %843 = vsyncadd %s813, %s842
          %s844 = sadd.s32 %s35, %s36
          %s845 = smul.addr %s34, 4
          %s846 = sadd.s32 %s844, %s845
          %s847 = smul.addr %s846, 64
          %s848 = scalar_lea.hbm %s10, %s847
          %s850 = sshll.u32 %s816, 4
          %s851 = int_to_ptr.vmem [resolvable:$true] %s850
          %853 = dma.vmem_to_hbm [thread:$0]  %s851, 64, %s848, %s813
        $region64: #{tpu_custom_call.1} parent=55 // pred_fallthru
          _
        // Predicated region
        $region65: #{tpu_custom_call.1} parent=55 // pred_check
          %p854 = pneg %p370
        $region66: #{tpu_custom_call.1} parent=55 // pred_check_branch
          %856 = sbr.rel (%p854) target = $region68
        $region67: #{tpu_custom_call.1} parent=55 // pred_region
          %s858 = ssub.s32 64, 64
          %859 = vsyncadd %s818, %s858
          %s860 = sadd.s32 %s35, %s36
          %s861 = smul.addr %s34, 4
          %s862 = sadd.s32 %s860, %s861
          %s863 = smul.addr %s862, 64
          %s864 = scalar_lea.hbm %s11, %s863
          %s866 = sshll.u32 %s821, 4
          %s867 = int_to_ptr.vmem [resolvable:$true] %s866
          %869 = dma.vmem_to_hbm [thread:$0]  %s867, 64, %s864, %s818
        $region68: #{tpu_custom_call.1} parent=55 // pred_fallthru
          _
      $region56: #{tpu_custom_call.1} parent=5 // pred_fallthru
        _
      %p870 = scmp.le.s32.totalorder 2, %s24
      // Predicated region
      $region69: #{tpu_custom_call.1} parent=5 // pred_check
        %p871 = pneg %p870
      $region70: #{tpu_custom_call.1} parent=5 // pred_check_branch
        %873 = sbr.rel (%p871) target = $region72
      $region71: #{tpu_custom_call.1} parent=5 // pred_region
        %s874 = ssub.s32 %s24, 2
        // Predicated region
        $region73: #{tpu_custom_call.1} parent=71 // pred_check
          %p875 = pneg %p316
        $region74: #{tpu_custom_call.1} parent=71 // pred_check_branch
          %877 = sbr.rel (%p875) target = $region76
        $region75: #{tpu_custom_call.1} parent=71 // pred_region
          %s878 = sand.u32 %s301, 1
          %s879 = scalar_lea.sflag [#allocation3], %s878
          %s880 = sand.u32 %s301, 1
          %s881 = smul.addr %s880, 4
          %s882 = scalar_lea.vmem [#allocation2], %s881
          %883 = dma.done %s879, 64
        $region76: #{tpu_custom_call.1} parent=71 // pred_fallthru
          _
        // Predicated region
        $region77: #{tpu_custom_call.1} parent=71 // pred_check
          %p884 = pneg %p346
        $region78: #{tpu_custom_call.1} parent=71 // pred_check_branch
          %886 = sbr.rel (%p884) target = $region80
        $region79: #{tpu_custom_call.1} parent=71 // pred_region
          %s887 = sand.u32 %s30, 1
          %s888 = scalar_lea.sflag [#allocation5], %s887
          %s889 = sand.u32 %s331, 1
          %s890 = smul.addr %s889, 4
          %s891 = scalar_lea.vmem [#allocation4], %s890
          %892 = dma.done %s888, 64
        $region80: #{tpu_custom_call.1} parent=71 // pred_fallthru
          _
        // Predicated region
        $region81: #{tpu_custom_call.1} parent=71 // pred_check
          %p893 = pneg %p376
        $region82: #{tpu_custom_call.1} parent=71 // pred_check_branch
          %895 = sbr.rel (%p893) target = $region84
        $region83: #{tpu_custom_call.1} parent=71 // pred_region
          %s896 = sand.u32 %s30, 1
          %s897 = scalar_lea.sflag [#allocation5], %s896
          %s898 = sand.u32 %s361, 1
          %s899 = smul.addr %s898, 4
          %s900 = scalar_lea.vmem [#allocation6], %s899
          %901 = dma.done %s897, 64
        $region84: #{tpu_custom_call.1} parent=71 // pred_fallthru
          _
      $region72: #{tpu_custom_call.1} parent=5 // pred_fallthru
        _
    $region6: #{tpu_custom_call.1} parent=1 // loop_footer
      %s28 = sadd.s32 1, %s24
    $region7: #{tpu_custom_call.1} parent=1 // loop_footer_branch
      %23 = sbr.rel target = $region3
    $region8: #{tpu_custom_call.1} parent=1 // loop_exit
      _
    %902 = vsyncpa [#allocation3], 1
    %s903 = scalar_lea.sflag [#allocation3], 1
    %904 = vsyncpa %s903, 1
    %905 = vsyncpa [#allocation5], 1
    %s906 = scalar_lea.sflag [#allocation5], 1
    %907 = vsyncpa %s906, 1

</llo_original>
